<compile_context>
chip_gen: v5e
topology: v5e:2x2
jax: 0.10.0
libtpu: 0.0.40
codegen_flags: <defaults>
</compile_context>

<pallas_src>
import functools
import numpy as np

import jax
import jax.numpy as jnp
from jax.experimental import pallas as pl
from jax.experimental.pallas import tpu as pltpu


# -----------------------------------------------------------------------------
# helpers
# -----------------------------------------------------------------------------
def _round_up(x, m):
    return (x + m - 1) // m * m


def _pick_tile(dim, candidates):
    for c in candidates:
        if dim % c == 0:
            return c
    return dim


# -----------------------------------------------------------------------------
# Tiled matmul kernel (bias + optional GELU fused in the epilogue)
# -----------------------------------------------------------------------------
def _matmul_kernel(x_ref, w_ref, b_ref, o_ref, acc_ref, *, activation):
    k = pl.program_id(2)

    @pl.when(k == 0)
    def _():
        acc_ref[...] = jnp.zeros_like(acc_ref)

    acc_ref[...] += jnp.dot(x_ref[...], w_ref[...],
                            preferred_element_type=jnp.float32)

    @pl.when(k == pl.num_programs(2) - 1)
    def _():
        r = acc_ref[...] + b_ref[...]
        if activation == "gelu":
            r = jax.nn.gelu(r)
        o_ref[...] = r.astype(o_ref.dtype)


def pallas_linear(x, w, b=None, activation=None):
    """x: (M, K), w: (K, N), b: (N,) or None -> (M, N) float32.
       bf16 operands on the MXU, f32 accumulation, bias/GELU fused epilogue."""
    M, K = x.shape
    N = w.shape[1]
    Mp, Kp, Np = _round_up(M, 128), _round_up(K, 128), _round_up(N, 128)

    xp = jnp.pad(x.astype(jnp.bfloat16), ((0, Mp - M), (0, Kp - K)))
    wp = jnp.pad(w.astype(jnp.bfloat16), ((0, Kp - K), (0, Np - N)))
    if b is None:
        bp = jnp.zeros((1, Np), jnp.float32)
    else:
        bp = jnp.pad(b.astype(jnp.float32), ((0, Np - N),)).reshape(1, Np)

    tm = _pick_tile(Mp, (256, 128))
    tn = _pick_tile(Np, (256, 128))
    tk = _pick_tile(Kp, (512, 256, 128))

    out = pl.pallas_call(
        functools.partial(_matmul_kernel, activation=activation),
        out_shape=jax.ShapeDtypeStruct((Mp, Np), jnp.float32),
        grid=(Mp // tm, Np // tn, Kp // tk),
        in_specs=[
            pl.BlockSpec((tm, tk), lambda i, j, k: (i, k)),
            pl.BlockSpec((tk, tn), lambda i, j, k: (k, j)),
            pl.BlockSpec((1, tn), lambda i, j, k: (0, j)),
        ],
        out_specs=pl.BlockSpec((tm, tn), lambda i, j, k: (i, j)),
        scratch_shapes=[pltpu.VMEM((tm, tn), jnp.float32)],
        compiler_params=pltpu.CompilerParams(
            dimension_semantics=("parallel", "parallel", "arbitrary")),
    )(xp, wp, bp)
    return out[:M, :N]


# -----------------------------------------------------------------------------
# Batched fused attention kernel (QK^T + mask + softmax + PV), grid over batch
# -----------------------------------------------------------------------------
def _attention_kernel(q_ref, k_ref, v_ref, bias_ref, o_ref, *, scale):
    q = q_ref[0].astype(jnp.bfloat16)          # (S, D)
    k = k_ref[0].astype(jnp.bfloat16)          # (S, D)
    v = v_ref[0].astype(jnp.bfloat16)          # (S, D)
    # q @ k^T without materializing a transpose
    s = jax.lax.dot_general(q, k, (((1,), (1,)), ((), ())),
                            preferred_element_type=jnp.float32) * scale
    s = s + bias_ref[0]                        # (S, S) + (1, S) key-mask bias
    s = s - jnp.max(s, axis=-1, keepdims=True)
    p = jnp.exp(s)
    denom = jnp.maximum(jnp.sum(p, axis=-1, keepdims=True), 1e-9)
    ctx = jnp.dot(p.astype(jnp.bfloat16), v, preferred_element_type=jnp.float32)
    o_ref[0] = ctx * pl.reciprocal(denom, approx=True)


def pallas_attention(q, k, v, key_bias):
    """q,k,v: (B, S, D) f32, key_bias: (B, 1, S) additive mask -> (B, S, D)."""
    B, S, D = q.shape
    scale = float(D) ** -0.5
    return pl.pallas_call(
        functools.partial(_attention_kernel, scale=scale),
        out_shape=jax.ShapeDtypeStruct((B, S, D), jnp.float32),
        grid=(B,),
        in_specs=[
            pl.BlockSpec((1, S, D), lambda b: (b, 0, 0)),
            pl.BlockSpec((1, S, D), lambda b: (b, 0, 0)),
            pl.BlockSpec((1, S, D), lambda b: (b, 0, 0)),
            pl.BlockSpec((1, 1, S), lambda b: (b, 0, 0)),
        ],
        out_specs=pl.BlockSpec((1, S, D), lambda b: (b, 0, 0)),
        compiler_params=pltpu.CompilerParams(dimension_semantics=("parallel",)),
    )(q, k, v, key_bias)


# -----------------------------------------------------------------------------
# Masked mean-pool kernel (SubwordAggregation), tiled over the word axis
# -----------------------------------------------------------------------------
def _masked_mean_kernel(x_ref, m_ref, o_ref):
    x = x_ref[...]                               # (bn, T, D)
    m = m_ref[...]                               # (bn, T, 1)
    s = jnp.sum(x * m, axis=1)                   # (bn, D)
    cnt = jnp.maximum(jnp.sum(m, axis=1), 1.0)   # clamp: no divide-by-zero
    o_ref[...] = s * pl.reciprocal(cnt, approx=True)


def masked_mean_pool(x, mask):
    """x: (N, T, D), mask: (N, T) -> (N, D)   (PoolingFunction, method='mean')."""
    x = x.astype(jnp.float32)
    N, T, D = x.shape
    bn = 256
    Np = _round_up(N, 8)
    if Np <= bn:
        bn = Np
    else:
        Np = _round_up(N, bn)
    if Np != N:
        x = jnp.pad(x, ((0, Np - N), (0, 0), (0, 0)))
        mask = jnp.pad(mask, ((0, Np - N), (0, 0)))
    m = mask.astype(jnp.float32).reshape(Np, T, 1)
    out = pl.pallas_call(
        _masked_mean_kernel,
        out_shape=jax.ShapeDtypeStruct((Np, D), jnp.float32),
        grid=(Np // bn,),
        in_specs=[
            pl.BlockSpec((bn, T, D), lambda i: (i, 0, 0)),
            pl.BlockSpec((bn, T, 1), lambda i: (i, 0, 0)),
        ],
        out_specs=pl.BlockSpec((bn, D), lambda i: (i, 0)),
        compiler_params=pltpu.CompilerParams(dimension_semantics=("parallel",)),
    )(x, m)
    return out[:N]


# -----------------------------------------------------------------------------
# Bidirectional LSTM: one pallas_call, grid (direction, time)
#   - backward direction via reversed-time index_map + length-mask gating
#   - "parallel" direction axis (second TensorCore on v7x)
# -----------------------------------------------------------------------------
def _bilstm_scan_kernel(xproj_ref, mask_ref, whh_ref, out_ref, hfin_ref,
                        h_scr, c_scr, *, hdim):
    t = pl.program_id(1)

    @pl.when(t == 0)
    def _():
        h_scr[...] = jnp.zeros_like(h_scr)
        c_scr[...] = jnp.zeros_like(c_scr)

    h = h_scr[...]                       # (N, Hd)
    c = c_scr[...]
    gates = xproj_ref[0] + jnp.dot(h, whh_ref[0],
                                   preferred_element_type=jnp.float32)  # (N, 4Hd)
    i = jax.nn.sigmoid(gates[:, 0 * hdim:1 * hdim])
    f = jax.nn.sigmoid(gates[:, 1 * hdim:2 * hdim])
    g = jnp.tanh(gates[:, 2 * hdim:3 * hdim])
    o = jax.nn.sigmoid(gates[:, 3 * hdim:4 * hdim])
    c_new = f * c + i * g
    h_new = o * jnp.tanh(c_new)

    m = mask_ref[0]                      # (N, 1) length mask for this timestep
    keep = m > 0.0
    h_upd = jnp.where(keep, h_new, h)
    c_upd = jnp.where(keep, c_new, c)
    h_scr[...] = h_upd
    c_scr[...] = c_upd

    out_ref[0] = h_upd * m               # padded positions -> 0 (pad_packed semantics)

    @pl.when(t == pl.num_programs(1) - 1)
    def _():
        hfin_ref[0] = h_upd              # state after last (masked) step


def bilstm(x, lens, params):
    """Bidirectional 1-layer LSTM over variable-length sequences (batch_first).
       x: (N, T, D); params['fwd'/'bwd'] in torch layout (w_ih, w_hh, b_ih, b_hh)."""
    N, T, D = x.shape
    w_ih_f, w_hh_f, b_ih_f, b_hh_f = params['fwd']
    w_ih_b, w_hh_b, b_ih_b, b_hh_b = params['bwd']
    Hd = w_hh_f.shape[1]
    H4 = 4 * Hd

    lens = lens.astype(jnp.int32)
    mask = (jnp.arange(T)[None, :] < lens[:, None]).astype(jnp.float32)   # (N, T)

    # fused fwd+bwd input projection: (N*T, D) @ (D, 8*Hd)
    w_ih_cat = jnp.concatenate([w_ih_f.T, w_ih_b.T], axis=1)
    b_cat = jnp.concatenate([b_ih_f + b_hh_f, b_ih_b + b_hh_b], axis=0)
    xproj = pallas_linear(x.reshape(N * T, D), w_ih_cat, b_cat)           # (N*T, 8Hd)
    xproj = xproj.reshape(N, T, 2, H4)
    xproj = jnp.transpose(xproj, (2, 1, 0, 3)).reshape(2 * T, N, H4)      # row = d*T + tau

    mask_t = jnp.transpose(mask, (1, 0)).reshape(T, N, 1)
    whh = jnp.stack([w_hh_f.T, w_hh_b.T], axis=0).astype(jnp.float32)     # (2, Hd, 4Hd)

    def time_idx(d, t):
        # fwd (d=0): t ;  bwd (d=1): T-1-t   (reversed scan instead of input reversal)
        return (1 - d) * t + d * (T - 1 - t)

    out_seq, h_fin = pl.pallas_call(
        functools.partial(_bilstm_scan_kernel, hdim=Hd),
        out_shape=(jax.ShapeDtypeStruct((2 * T, N, Hd), jnp.float32),
                   jax.ShapeDtypeStruct((2, N, Hd), jnp.float32)),
        grid=(2, T),
        in_specs=[
            pl.BlockSpec((1, N, H4), lambda d, t: (d * T + time_idx(d, t), 0, 0)),
            pl.BlockSpec((1, N, 1), lambda d, t: (time_idx(d, t), 0, 0)),
            pl.BlockSpec((1, Hd, H4), lambda d, t: (d, 0, 0)),
        ],
        out_specs=(pl.BlockSpec((1, N, Hd), lambda d, t: (d * T + time_idx(d, t), 0, 0)),
                   pl.BlockSpec((1, N, Hd), lambda d, t: (d, 0, 0))),
        scratch_shapes=[pltpu.VMEM((N, Hd), jnp.float32),
                        pltpu.VMEM((N, Hd), jnp.float32)],
        compiler_params=pltpu.CompilerParams(
            dimension_semantics=("parallel", "arbitrary")),
    )(xproj, mask_t, whh)

    out_seq = out_seq.reshape(2, T, N, Hd)
    out = jnp.concatenate([jnp.transpose(out_seq[0], (1, 0, 2)),
                           jnp.transpose(out_seq[1], (1, 0, 2))], axis=-1)  # (N, T, 2Hd)
    h_cat = jnp.concatenate([h_fin[0], h_fin[1]], axis=-1)                  # (N, 2Hd) tail+head
    return out, h_cat


# -----------------------------------------------------------------------------
# Mini PLM stand-in (1-layer transformer encoder, single head)
# -----------------------------------------------------------------------------
def layer_norm(x, g, b, eps=1e-12):
    mu = jnp.mean(x, axis=-1, keepdims=True)
    var = jnp.mean((x - mu) ** 2, axis=-1, keepdims=True)
    return (x - mu) / jnp.sqrt(var + eps) * g + b


def mini_plm(input_ids, valid_lens, p):
    B, S = input_ids.shape
    D = p['tok_emb'].shape[1]
    x = p['tok_emb'][input_ids] + p['pos_emb'][None, :S, :]
    x = layer_norm(x, p['ln_emb_g'], p['ln_emb_b'])

    xf = x.reshape(B * S, D)
    # fused QKV projection: (D, 3D)
    wqkv = jnp.concatenate([p['wq'], p['wk'], p['wv']], axis=1)
    bqkv = jnp.concatenate([p['bq'], p['bk'], p['bv']], axis=0)
    qkv = pallas_linear(xf, wqkv, bqkv).reshape(B, S, 3 * D)
    q, k, v = qkv[..., :D], qkv[..., D:2 * D], qkv[..., 2 * D:]

    key_mask = jnp.arange(S)[None, :] < valid_lens[:, None]     # (B, S)
    key_bias = jnp.where(key_mask, 0.0, -1e9).astype(jnp.float32).reshape(B, 1, S)
    ctx = pallas_attention(q, k, v, key_bias)                   # fused batched attention

    attn_out = pallas_linear(ctx.reshape(B * S, D), p['wo'], p['bo']).reshape(B, S, D)
    x = layer_norm(x + attn_out, p['ln1_g'], p['ln1_b'])

    h = pallas_linear(x.reshape(B * S, D), p['w1'], p['b1'], activation="gelu")  # fused GELU
    ff = pallas_linear(h, p['w2'], p['b2']).reshape(B, S, D)
    x = layer_norm(x + ff, p['ln2_g'], p['ln2_b'])
    return x


# -----------------------------------------------------------------------------
# GraphInputLayerPLM forward
# -----------------------------------------------------------------------------
def graph_input_layer_plm_forward(params, batch):
    # 1) PLM encoder
    outputs = mini_plm(batch['input_ids'], batch['plm_valid_lens'], params['plm'])  # (B, S, D)
    flat = outputs.reshape(-1, outputs.shape[-1])                                   # (B*S, D)

    # 2) SubwordAggregation: masked_select + masked_scatter -> static gathers,
    #    then mean-pool over subwords (tiled Pallas reduction kernel).
    def aggregate(sub_idx, sub_mask):
        gathered = flat[sub_idx]                       # (N_words, max_sub, D)
        return masked_mean_pool(gathered, sub_mask)

    q_words = aggregate(batch['q_sub_idx'], batch['q_sub_mask'])   # (total_q_words, D)
    t_words = aggregate(batch['t_sub_idx'], batch['t_sub_mask'])   # (total_t_words, D)
    c_words = aggregate(batch['c_sub_idx'], batch['c_sub_mask'])   # (total_c_words, D)

    def scatter_words(words, idx, mask):
        return words[idx] * mask.astype(jnp.float32)[..., None]

    new_q = scatter_words(q_words, batch['q_word_idx'], batch['q_word_mask'])  # (B, maxQ, D)
    new_t = scatter_words(t_words, batch['t_word_idx'], batch['t_word_mask'])  # (n_tables, maxTW, D)
    new_c = scatter_words(c_words, batch['c_word_idx'], batch['c_word_mask'])  # (n_cols, maxCW, D)

    # 3) Dropout(p=0.0) -> identity.

    # 4) InputRNNLayer (cell='lstm', schema_aggregation='head+tail')
    q_out, _ = bilstm(new_q, batch['question_lens'], params['question_lstm'])  # (B, maxQ, H)
    H = q_out.shape[-1]
    q_flat = q_out.reshape(-1, H)[batch['q_valid_flat_idx']]                   # (total_q_words, H)

    # merge table + column into ONE schema-LSTM call (shared weights)
    maxT = max(new_t.shape[1], new_c.shape[1])

    def pad_time(a):
        return jnp.pad(a, ((0, 0), (0, maxT - a.shape[1]), (0, 0)))

    schema_in = jnp.concatenate([pad_time(new_t), pad_time(new_c)], axis=0)
    schema_lens = jnp.concatenate([batch['table_word_lens'],
                                   batch['column_word_lens']], axis=0)
    _, schema_hidden = bilstm(schema_in, schema_lens, params['schema_lstm'])
    n_tables = new_t.shape[0]
    t_hidden = schema_hidden[:n_tables]                                        # (n_tables, H)
    c_hidden = schema_hidden[n_tables:]                                        # (n_cols, H)

    # 5) per-example interleave: [q_b, tables_b, columns_b] for each example, concat.
    pieces = []
    qo = to = co = 0
    for b in range(len(batch['question_lens_list'])):
        ql = batch['question_lens_list'][b]
        tl = batch['table_lens_list'][b]
        cl = batch['column_lens_list'][b]
        pieces.append(q_flat[qo:qo + ql])
        pieces.append(t_hidden[to:to + tl])
        pieces.append(c_hidden[co:co + cl])
        qo += ql
        to += tl
        co += cl
    return jnp.concatenate(pieces, axis=0)


# -----------------------------------------------------------------------------
# Deterministic parameters & synthetic batch
# -----------------------------------------------------------------------------
def init_params(key, vocab, S, D, H):
    Hd = H // 2
    keys = jax.random.split(key, 48)
    ki = iter(keys)

    def nrm(shape, scale=0.1):
        return jax.random.normal(next(ki), shape, jnp.float32) * scale

    plm = dict(
        tok_emb=nrm((vocab, D)), pos_emb=nrm((S, D)),
        ln_emb_g=jnp.ones((D,), jnp.float32), ln_emb_b=jnp.zeros((D,), jnp.float32),
        wq=nrm((D, D)), bq=nrm((D,)), wk=nrm((D, D)), bk=nrm((D,)),
        wv=nrm((D, D)), bv=nrm((D,)), wo=nrm((D, D)), bo=nrm((D,)),
        ln1_g=jnp.ones((D,), jnp.float32), ln1_b=jnp.zeros((D,), jnp.float32),
        w1=nrm((D, 4 * D)), b1=nrm((4 * D,)), w2=nrm((4 * D, D)), b2=nrm((D,)),
        ln2_g=jnp.ones((D,), jnp.float32), ln2_b=jnp.zeros((D,), jnp.float32),
    )

    def lstm_dir():
        # torch layout: (w_ih, w_hh, b_ih, b_hh), gate order i,f,g,o
        return (nrm((4 * Hd, D)), nrm((4 * Hd, Hd)), nrm((4 * Hd,)), nrm((4 * Hd,)))

    question_lstm = dict(fwd=lstm_dir(), bwd=lstm_dir())
    schema_lstm = dict(fwd=lstm_dir(), bwd=lstm_dir())   # share_lstm=False
    return dict(plm=plm, question_lstm=question_lstm, schema_lstm=schema_lstm)


def _make_subword(words):
    n = len(words)
    max_sub = max(len(w) for w in words)
    idx = np.zeros((n, max_sub), dtype=np.int32)
    msk = np.zeros((n, max_sub), dtype=bool)
    for i, w in enumerate(words):
        for j, p in enumerate(w):
            idx[i, j] = p
            msk[i, j] = True
    return idx, msk


def _make_word_scatter(counts):
    n_rows = len(counts)
    max_len = max(counts)
    idx = np.zeros((n_rows, max_len), dtype=np.int32)
    msk = np.zeros((n_rows, max_len), dtype=bool)
    w = 0
    for r, c in enumerate(counts):
        for j in range(c):
            idx[r, j] = w
            msk[r, j] = True
            w += 1
    return idx, msk


def build_batch(spec, S):
    B = len(spec)
    input_ids = np.zeros((B, S), dtype=np.int32)
    valid_lens = np.zeros((B,), dtype=np.int32)
    q_words, t_words, c_words = [], [], []
    question_lens, table_word_lens, column_word_lens = [], [], []
    table_lens, column_lens = [], []

    next_id = 10
    for b, ex in enumerate(spec):
        pos = 0
        input_ids[b, pos] = 1  # [CLS]
        pos += 1
        question_lens.append(len(ex['q']))
        for n_sub in ex['q']:
            word = []
            for _ in range(n_sub):
                input_ids[b, pos] = next_id; next_id += 1
                word.append(b * S + pos); pos += 1
            q_words.append(word)
        input_ids[b, pos] = 2  # [SEP]
        pos += 1
        table_lens.append(len(ex['tables']))
        for tab in ex['tables']:
            table_word_lens.append(len(tab))
            for n_sub in tab:
                word = []
                for _ in range(n_sub):
                    input_ids[b, pos] = next_id; next_id += 1
                    word.append(b * S + pos); pos += 1
                t_words.append(word)
        column_lens.append(len(ex['cols']))
        for col in ex['cols']:
            column_word_lens.append(len(col))
            for n_sub in col:
                word = []
                for _ in range(n_sub):
                    input_ids[b, pos] = next_id; next_id += 1
                    word.append(b * S + pos); pos += 1
                c_words.append(word)
        valid_lens[b] = pos

    q_sub_idx, q_sub_mask = _make_subword(q_words)
    t_sub_idx, t_sub_mask = _make_subword(t_words)
    c_sub_idx, c_sub_mask = _make_subword(c_words)

    q_word_idx, q_word_mask = _make_word_scatter(question_lens)      # (B, maxQ)
    t_word_idx, t_word_mask = _make_word_scatter(table_word_lens)    # (n_tables, maxTW)
    c_word_idx, c_word_mask = _make_word_scatter(column_word_lens)   # (n_cols, maxCW)

    q_valid_flat_idx = np.nonzero(q_word_mask.reshape(-1))[0].astype(np.int32)

    batch = dict(
        input_ids=jnp.asarray(input_ids),
        plm_valid_lens=jnp.asarray(valid_lens),
        q_sub_idx=jnp.asarray(q_sub_idx), q_sub_mask=jnp.asarray(q_sub_mask),
        t_sub_idx=jnp.asarray(t_sub_idx), t_sub_mask=jnp.asarray(t_sub_mask),
        c_sub_idx=jnp.asarray(c_sub_idx), c_sub_mask=jnp.asarray(c_sub_mask),
        q_word_idx=jnp.asarray(q_word_idx), q_word_mask=jnp.asarray(q_word_mask),
        t_word_idx=jnp.asarray(t_word_idx), t_word_mask=jnp.asarray(t_word_mask),
        c_word_idx=jnp.asarray(c_word_idx), c_word_mask=jnp.asarray(c_word_mask),
        q_valid_flat_idx=jnp.asarray(q_valid_flat_idx),
        question_lens=jnp.asarray(np.array(question_lens, np.int32)),
        table_word_lens=jnp.asarray(np.array(table_word_lens, np.int32)),
        column_word_lens=jnp.asarray(np.array(column_word_lens, np.int32)),
        question_lens_list=question_lens,
        table_lens_list=table_lens,
        column_lens_list=column_lens,
    )
    expected_rows = sum(question_lens) + len(table_word_lens) + len(column_word_lens)
    return batch, expected_rows


if __name__ == "__main__":
    # small but lane-dense shapes: batch=2, plm_seq=32, plm_hidden=128, rnn hidden=128
    B, S, D, H = 2, 32, 128, 128
    VOCAB = 64

    spec = [
        dict(q=[1, 2, 1], tables=[[1, 1], [2]], cols=[[1], [2], [1]]),
        dict(q=[1, 1, 1, 2], tables=[[1, 2]], cols=[[1, 1], [1]]),
    ]
    batch, expected_rows = build_batch(spec, S)
    params = init_params(jax.random.PRNGKey(0), VOCAB, S, D, H)

    out = graph_input_layer_plm_forward(params, batch)
    out = jax.block_until_ready(out)

    assert out.shape == (expected_rows, H), out.shape
    assert bool(jnp.all(jnp.isfinite(out)))
    print("KERNEL_OK")
</pallas_src>

<mosaic_0001>
module attributes {stable_mosaic.version = 11 : i64} {
  func.func @_matmul_kernel(%arg0: i32, %arg1: i32, %arg2: i32, %arg3: memref<128x128xbf16, #tpu.memory_space<vmem>>, %arg4: memref<128x128xbf16, #tpu.memory_space<vmem>>, %arg5: memref<1x128xf32, #tpu.memory_space<vmem>>, %arg6: memref<128x128xf32, #tpu.memory_space<vmem>>, %arg7: memref<128x128xf32, #tpu.memory_space<vmem>>) attributes {dimension_semantics = [#tpu.dimension_semantics<parallel>, #tpu.dimension_semantics<parallel>, #tpu.dimension_semantics<arbitrary>], iteration_bounds = array<i64: 1, 3, 1>, scalar_prefetch = 0 : i64, scratch_operands = 1 : i64, tpu.core_type = #tpu.core_type<tc>, window_params = [{transform_indices = @transform_0, window_bounds = array<i64: 128, 128>}, {transform_indices = @transform_1, window_bounds = array<i64: 128, 128>}, {transform_indices = @transform_2, window_bounds = array<i64: 1, 128>}, {transform_indices = @transform_3, window_bounds = array<i64: 128, 128>}]} {
    %c0_i32 = arith.constant 0 : i32
    %0 = arith.cmpi eq, %arg2, %c0_i32 : i32
    %1 = arith.extui %0 : i1 to i32
    %c0_i32_0 = arith.constant 0 : i32
    %2 = arith.cmpi ne, %1, %c0_i32_0 : i32
    scf.if %2 {
      %cst_10 = arith.constant 0.000000e+00 : f32
      %12 = vector.broadcast %cst_10 : f32 to vector<128x128xf32>
      %c0_11 = arith.constant 0 : index
      %c0_12 = arith.constant 0 : index
      %13 = vector.load %arg7[%c0_11, %c0_12] : memref<128x128xf32, #tpu.memory_space<vmem>>, vector<128x128xf32>
      tpu.vector_store %arg7[%c0_11, %c0_12], %12 {strides = array<i32>} : memref<128x128xf32, #tpu.memory_space<vmem>>, vector<128x128xf32>,
    } else {
    }
    %c0 = arith.constant 0 : index
    %c0_1 = arith.constant 0 : index
    %3 = vector.load %arg7[%c0, %c0_1] : memref<128x128xf32, #tpu.memory_space<vmem>>, vector<128x128xf32>
    %c0_2 = arith.constant 0 : index
    %c0_3 = arith.constant 0 : index
    %4 = vector.load %arg3[%c0_2, %c0_3] : memref<128x128xbf16, #tpu.memory_space<vmem>>, vector<128x128xbf16>
    %c0_4 = arith.constant 0 : index
    %c0_5 = arith.constant 0 : index
    %5 = vector.load %arg4[%c0_4, %c0_5] : memref<128x128xbf16, #tpu.memory_space<vmem>>, vector<128x128xbf16>
    %cst = arith.constant dense<0.000000e+00> : vector<128x128xf32>
    %6 = tpu.matmul %4, %5, %cst {dimension_numbers = #tpu.dot_dimension_numbers<[1], [0], [0], [1], [0, 0, 1, 1], [], []>} : vector<128x128xbf16>, vector<128x128xbf16>, vector<128x128xf32> -> vector<128x128xf32>
    %7 = arith.addf %3, %6 : vector<128x128xf32>
    %c0_6 = arith.constant 0 : index
    %c0_7 = arith.constant 0 : index
    %8 = vector.load %arg7[%c0_6, %c0_7] : memref<128x128xf32, #tpu.memory_space<vmem>>, vector<128x128xf32>
    tpu.vector_store %arg7[%c0_6, %c0_7], %7 {strides = array<i32>} : memref<128x128xf32, #tpu.memory_space<vmem>>, vector<128x128xf32>,
    %c0_i32_8 = arith.constant 0 : i32
    %9 = arith.cmpi eq, %arg2, %c0_i32_8 : i32
    %10 = arith.extui %9 : i1 to i32
    %c0_i32_9 = arith.constant 0 : i32
    %11 = arith.cmpi ne, %10, %c0_i32_9 : i32
    scf.if %11 {
      %c0_10 = arith.constant 0 : index
      %c0_11 = arith.constant 0 : index
      %12 = vector.load %arg7[%c0_10, %c0_11] : memref<128x128xf32, #tpu.memory_space<vmem>>, vector<128x128xf32>
      %c0_12 = arith.constant 0 : index
      %c0_13 = arith.constant 0 : index
      %13 = vector.load %arg5[%c0_12, %c0_13] : memref<1x128xf32, #tpu.memory_space<vmem>>, vector<1x128xf32>
      %14 = vector.broadcast %13 : vector<1x128xf32> to vector<128x128xf32>
      %15 = arith.addf %12, %14 : vector<128x128xf32>
      %c0_14 = arith.constant 0 : index
      %c0_15 = arith.constant 0 : index
      %16 = vector.load %arg6[%c0_14, %c0_15] : memref<128x128xf32, #tpu.memory_space<vmem>>, vector<128x128xf32>
      tpu.vector_store %arg6[%c0_14, %c0_15], %15 {strides = array<i32>} : memref<128x128xf32, #tpu.memory_space<vmem>>, vector<128x128xf32>,
    } else {
    }
    return
  }
  func.func @transform_0(%arg0: i32, %arg1: i32, %arg2: i32) -> (i32, i32) {
    %c0_i32 = arith.constant 0 : i32
    return %arg0, %arg2 : i32, i32
  }
  func.func @transform_1(%arg0: i32, %arg1: i32, %arg2: i32) -> (i32, i32) {
    %c0_i32 = arith.constant 0 : i32
    return %arg2, %arg1 : i32, i32
  }
  func.func @transform_2(%arg0: i32, %arg1: i32, %arg2: i32) -> (i32, i32) {
    %c0_i32 = arith.constant 0 : i32
    %c0_i32_0 = arith.constant 0 : i32
    return %c0_i32, %arg1 : i32, i32
  }
  func.func @transform_3(%arg0: i32, %arg1: i32, %arg2: i32) -> (i32, i32) {
    %c0_i32 = arith.constant 0 : i32
    return %arg0, %arg1 : i32, i32
  }
}

</mosaic_0001>

<llo_original>
// kernel: tpu_custom_call.1
$region0: #{tpu_custom_call.1}
  #allocation0 [shape = 'u32[]', space=smem, size = 0x4, offset = 0x4, fixed_abs, tag = 'smem constant byte address 0x4 - core index']
  #allocation1 [shape = 'u32[72,128]{1,0:T(1,128)}', space=vmem, size = 0x9000, scoped, tag = 'internal scratch']
  #allocation2 [shape = 'f32[128,128]{1,0:T(8,128)}', space=vmem, size = 0x10000, scoped, tag = 'scratch operand']
  %s0 = inlined_call_operand.hbm [shape: bf16[128,128], index: 0, kind: input, shape index: {}]
  %s1 = inlined_call_operand.hbm [shape: bf16[128,384], index: 1, kind: input, shape index: {}]
  %s2 = inlined_call_operand.hbm [shape: f32[1,384], index: 2, kind: input, shape index: {}]
  %s3 = inlined_call_operand.hbm [shape: f32[128,384], index: 3, kind: output, shape index: {}]
  %s4 = sld [smem:[#allocation0]]
  $region65: #{tpu_custom_call.1} parent=0
    _
  %s6 = ssub.s32 1, %s4
  %s7 = scalar_select 0, %s6, %s4
  $region1: #{tpu_custom_call.1} parent=0
    #allocation3 [shape = 'u8[32768]{0}', space=vmem, size = 0x8000, scoped, tag = 'input window, operand 0, single buffered']
    #allocation4 [shape = 's32[2]{0}', space=sflag, size = 0x8, scoped, tag = 'scoped memory for tpu_custom_call.1']
    #allocation5 [shape = 's32[2]{0}', space=sflag, size = 0x8, scoped, tag = 'scoped memory for tpu_custom_call.1']
    #allocation6 [shape = 'u8[65536]{0}', space=vmem, size = 0x10000, scoped, tag = 'input window, operand 1']
    #allocation7 [shape = 's32[2]{0}', space=sflag, size = 0x8, scoped, tag = 'scoped memory for tpu_custom_call.1']
    #allocation8 [shape = 'u8[1024]{0}', space=vmem, size = 0x400, scoped, tag = 'input window, operand 2']
    #allocation9 [shape = 'u8[131072]{0}', space=vmem, size = 0x20000, scoped, tag = 'output window, operand 0']
    %8 = vsyncpa [#allocation4], 0
    %9 = vsyncpa [#allocation7], 0
    %s10 = scalar_lea.sflag [#allocation7], 1
    %11 = vsyncpa %s10, 0
    %12 = vsyncpa [#allocation5], 0
    %s13 = scalar_lea.sflag [#allocation5], 1
    %14 = vsyncpa %s13, 0
    loop: start=0, step=1, limit=5
    $region2: #{tpu_custom_call.1} parent=1 // loop_pre_header
      _
    $region3: #{tpu_custom_call.1} parent=1 // loop_header
      %s16 = sphi 0, %s20
      %p17 = scmp.ge.s32.totalorder %s16, 5
      %s23 = sphi 0, %s42
      %s24 = sphi 0, %s38
      %s25 = sphi 0, %s34
      %s26 = sphi 0, %s23
      %s27 = sphi 0, %s24
      %s28 = sphi 0, %s25
      %s29 = sphi 0, %s26
      %s30 = sphi 0, %s27
      %s31 = sphi 0, %s28
      %s47 = sphi 0, %s49
      %s50 = sphi 0, %s47
      %s51 = sphi 0, %s50
      %s67 = sphi 0, %s51
      %s75 = sphi 0, %s77
      %s78 = sphi 0, %s75
      %s79 = sphi 0, %s78
      %s95 = sphi 0, %s79
      %s101 = sphi 0, %s103
      %s104 = sphi 0, %s101
      %s105 = sphi 0, %s104
      %s121 = sphi 0, %s105
      %s129 = sphi 0, %s131
      %s132 = sphi 0, %s129
      %s133 = sphi 0, %s132
      %s149 = sphi 0, %s133
    $region4: #{tpu_custom_call.1} parent=1 // loop_header_branch
      %19 = sbr.rel (%p17) target = $region8
    $region5: #{tpu_custom_call.1} parent=1 // loop_body
      %s21 = ssub.s32 %s16, 1
      %s22 = ssub.s32 %s16, 2
      %s32 = sadd.s32 1, %s25
      %p33 = scmp.ge.s32.totalorder %s32, 1
      %s34 = scalar_select %p33, 0, %s32
      %s35 = sadd.s32 1, %s24
      %s36 = scalar_select %p33, %s35, %s24
      %p37 = scmp.ge.s32.totalorder %s36, 3
      %s38 = scalar_select %p37, 0, %s36
      %s39 = sadd.s32 1, %s23
      %s40 = scalar_select %p37, %s39, %s23
      %p41 = scmp.ge.s32.totalorder %s40, 1
      %s42 = scalar_select %p41, 0, %s40
      %s43 = ssub.s32 %s23, %s42
      %s44 = ssub.s32 %s25, %s34
      %s45 = sor.u32 %s43, %s44
      %p46 = scmp.eq.s32.totalorder %s45, 0
      %s48 = sadd.s32 %s47, 1
      %s49 = scalar_select %p46, %s47, %s48
      %p52 = pneg %p46
      %p53 = scmp.eq.s32.totalorder %s16, 2
      %p54 = por %p52, %p53
      %p55 = scmp.ne.s32.totalorder %s47, %s50
      %p56 = scmp.eq.s32.totalorder %s16, 0
      %p57 = por %p55, %p56
      %p58 = scmp.ne.s32.totalorder %s47, %s50
      %p59 = scmp.eq.s32.totalorder %s21, 2
      %p60 = por %p58, %p59
      %p61 = scmp.ne.s32.totalorder %s50, %s51
      %p62 = scmp.eq.s32.totalorder %s21, 0
      %p63 = por %p61, %p62
      %p64 = scmp.ne.s32.totalorder %s50, %s51
      %p65 = scmp.eq.s32.totalorder %s22, 2
      %p66 = por %p64, %p65
      %p68 = scmp.ne.s32.totalorder %s51, %s67
      %p69 = scmp.eq.s32.totalorder %s22, 0
      %p70 = por %p68, %p69
      %s71 = ssub.s32 %s25, %s34
      %s72 = ssub.s32 %s24, %s38
      %s73 = sor.u32 %s71, %s72
      %p74 = scmp.eq.s32.totalorder %s73, 0
      %s76 = sadd.s32 %s75, 1
      %s77 = scalar_select %p74, %s75, %s76
      %p80 = pneg %p74
      %p81 = scmp.eq.s32.totalorder %s16, 2
      %p82 = por %p80, %p81
      %p83 = scmp.ne.s32.totalorder %s75, %s78
      %p84 = scmp.eq.s32.totalorder %s16, 0
      %p85 = por %p83, %p84
      %p86 = scmp.ne.s32.totalorder %s75, %s78
      %p87 = scmp.eq.s32.totalorder %s21, 2
      %p88 = por %p86, %p87
      %p89 = scmp.ne.s32.totalorder %s78, %s79
      %p90 = scmp.eq.s32.totalorder %s21, 0
      %p91 = por %p89, %p90
      %p92 = scmp.ne.s32.totalorder %s78, %s79
      %p93 = scmp.eq.s32.totalorder %s22, 2
      %p94 = por %p92, %p93
      %p96 = scmp.ne.s32.totalorder %s79, %s95
      %p97 = scmp.eq.s32.totalorder %s22, 0
      %p98 = por %p96, %p97
      %s99 = ssub.s32 %s24, %s38
      %p100 = scmp.eq.s32.totalorder %s99, 0
      %s102 = sadd.s32 %s101, 1
      %s103 = scalar_select %p100, %s101, %s102
      %p106 = pneg %p100
      %p107 = scmp.eq.s32.totalorder %s16, 2
      %p108 = por %p106, %p107
      %p109 = scmp.ne.s32.totalorder %s101, %s104
      %p110 = scmp.eq.s32.totalorder %s16, 0
      %p111 = por %p109, %p110
      %p112 = scmp.ne.s32.totalorder %s101, %s104
      %p113 = scmp.eq.s32.totalorder %s21, 2
      %p114 = por %p112, %p113
      %p115 = scmp.ne.s32.totalorder %s104, %s105
      %p116 = scmp.eq.s32.totalorder %s21, 0
      %p117 = por %p115, %p116
      %p118 = scmp.ne.s32.totalorder %s104, %s105
      %p119 = scmp.eq.s32.totalorder %s22, 2
      %p120 = por %p118, %p119
      %p122 = scmp.ne.s32.totalorder %s105, %s121
      %p123 = scmp.eq.s32.totalorder %s22, 0
      %p124 = por %p122, %p123
      %s125 = ssub.s32 %s23, %s42
      %s126 = ssub.s32 %s24, %s38
      %s127 = sor.u32 %s125, %s126
      %p128 = scmp.eq.s32.totalorder %s127, 0
      %s130 = sadd.s32 %s129, 1
      %s131 = scalar_select %p128, %s129, %s130
      %p134 = pneg %p128
      %p135 = scmp.eq.s32.totalorder %s16, 2
      %p136 = por %p134, %p135
      %p137 = scmp.ne.s32.totalorder %s129, %s132
      %p138 = scmp.eq.s32.totalorder %s16, 0
      %p139 = por %p137, %p138
      %p140 = scmp.ne.s32.totalorder %s129, %s132
      %p141 = scmp.eq.s32.totalorder %s21, 2
      %p142 = por %p140, %p141
      %p143 = scmp.ne.s32.totalorder %s132, %s133
      %p144 = scmp.eq.s32.totalorder %s21, 0
      %p145 = por %p143, %p144
      %p146 = scmp.ne.s32.totalorder %s132, %s133
      %p147 = scmp.eq.s32.totalorder %s22, 2
      %p148 = por %p146, %p147
      %p150 = scmp.ne.s32.totalorder %s133, %s149
      %p151 = scmp.eq.s32.totalorder %s22, 0
      %p152 = por %p150, %p151
      %p153 = scmp.le.s32.totalorder 1, %s16
      %p154 = scmp.lt.s32.totalorder %s16, 4
      %p155 = pnand %p153, %p154
      %p156 = pneg %p155
      // Predicated region
      $region9: #{tpu_custom_call.1} parent=5 // pred_check
        _
      $region10: #{tpu_custom_call.1} parent=5 // pred_check_branch
        %158 = sbr.rel (%p155) target = $region12
      $region11: #{tpu_custom_call.1} parent=5 // pred_region
        %s159 = ssub.s32 %s16, 1
        // Predicated region
        $region13: #{tpu_custom_call.1} parent=11 // pred_check
          %p160 = pneg %p63
        $region14: #{tpu_custom_call.1} parent=11 // pred_check_branch
          %162 = sbr.rel (%p160) target = $region16
        $region15: #{tpu_custom_call.1} parent=11 // pred_region
          %s163 = smul.u32 16, %s26
          %165 = vsyncadd [#allocation4], 0
          %s166 = sadd.s32 %s28, %s163
          %s167 = smul.addr %s166, 4
          %s168 = scalar_lea.hbm %s0, %s167
          %s169 = sshll.u32 %s168, 4
          %s170 = int_to_ptr.hbm [resolvable:$true] %s169
          %s171 = sshll.u32 [#allocation3], 4
          %s172 = int_to_ptr.vmem [resolvable:$true] %s171
          %177 = dma.hbm_to_vmem [thread:$0]  %s170, 1024, %s172, [#allocation4], 64, 64, 4
        $region16: #{tpu_custom_call.1} parent=11 // pred_fallthru
          _
      $region12: #{tpu_custom_call.1} parent=5 // pred_fallthru
        _
      %p178 = scmp.lt.s32.totalorder %s16, 3
      // Predicated region
      $region17: #{tpu_custom_call.1} parent=5 // pred_check
        %p179 = pneg %p178
      $region18: #{tpu_custom_call.1} parent=5 // pred_check_branch
        %181 = sbr.rel (%p179) target = $region20
      $region19: #{tpu_custom_call.1} parent=5 // pred_region
        // Predicated region
        $region21: #{tpu_custom_call.1} parent=19 // pred_check
          %p182 = pneg %p85
        $region22: #{tpu_custom_call.1} parent=19 // pred_check_branch
          %184 = sbr.rel (%p182) target = $region24
        $region23: #{tpu_custom_call.1} parent=19 // pred_region
          %s185 = sand.u32 %s16, 1
          %s186 = scalar_lea.sflag [#allocation7], %s185
          %s187 = sand.u32 %s75, 1
          %s188 = smul.addr %s187, 64
          %s189 = scalar_lea.vmem [#allocation6], %s188
          %s190 = smul.u32 16, %s25
          %192 = vsyncadd %s186, 0
          %s193 = smul.addr %s190, 3
          %s194 = sadd.s32 %s24, %s193
          %s195 = smul.addr %s194, 4
          %s196 = scalar_lea.hbm %s1, %s195
          %s197 = sshll.u32 %s196, 4
          %s198 = int_to_ptr.hbm [resolvable:$true] %s197
          %s199 = sshll.u32 %s189, 4
          %s200 = int_to_ptr.vmem [resolvable:$true] %s199
          %205 = dma.hbm_to_vmem [thread:$0]  %s198, 1024, %s200, %s186, 192, 64, 4
        $region24: #{tpu_custom_call.1} parent=19 // pred_fallthru
          _
        // Predicated region
        $region25: #{tpu_custom_call.1} parent=19 // pred_check
          %p206 = pneg %p111
        $region26: #{tpu_custom_call.1} parent=19 // pred_check_branch
          %208 = sbr.rel (%p206) target = $region28
        $region27: #{tpu_custom_call.1} parent=19 // pred_region
          %s209 = sand.u32 %s16, 1
          %s210 = scalar_lea.sflag [#allocation7], %s209
          %s211 = sand.u32 %s101, 1
          %s212 = scalar_lea.vmem [#allocation8], %s211
          %214 = vsyncadd %s210, 0
          %s215 = scalar_lea.hbm %s2, %s24
          %s217 = sshll.u32 %s215, 4
          %s218 = int_to_ptr.hbm [resolvable:$true] %s217
          %s219 = sshll.u32 %s212, 4
          %s220 = int_to_ptr.vmem [resolvable:$true] %s219
          %222 = dma.hbm_to_vmem [thread:$0]  %s218, 16, %s220, %s210
        $region28: #{tpu_custom_call.1} parent=19 // pred_fallthru
          _
      $region20: #{tpu_custom_call.1} parent=5 // pred_fallthru
        _
      %p223 = scmp.le.s32.totalorder 1, %s16
      %p224 = scmp.lt.s32.totalorder %s16, 4
      %p225 = pnand %p223, %p224
      %p226 = pneg %p225
      // Predicated region
      $region29: #{tpu_custom_call.1} parent=5 // pred_check
        _
      $region30: #{tpu_custom_call.1} parent=5 // pred_check_branch
        %228 = sbr.rel (%p225) target = $region32
      $region31: #{tpu_custom_call.1} parent=5 // pred_region
        %s229 = ssub.s32 %s16, 1
        // Predicated region
        $region33: #{tpu_custom_call.1} parent=31 // pred_check
          %p230 = pneg %p63
        $region34: #{tpu_custom_call.1} parent=31 // pred_check_branch
          %232 = sbr.rel (%p230) target = $region36
        $region35: #{tpu_custom_call.1} parent=31 // pred_region
          %234 = dma.done [#allocation4], 1024
        $region36: #{tpu_custom_call.1} parent=31 // pred_fallthru
          _
        %s235 = sand.u32 %s21, 1
        %s236 = scalar_lea.sflag [#allocation7], %s235
        %s237 = sand.u32 %s78, 1
        %s238 = smul.addr %s237, 64
        %s239 = scalar_lea.vmem [#allocation6], %s238
        // Predicated region
        $region37: #{tpu_custom_call.1} parent=31 // pred_check
          %p240 = pneg %p91
        $region38: #{tpu_custom_call.1} parent=31 // pred_check_branch
          %242 = sbr.rel (%p240) target = $region40
        $region39: #{tpu_custom_call.1} parent=31 // pred_region
          %244 = dma.done %s236, 1024
        $region40: #{tpu_custom_call.1} parent=31 // pred_fallthru
          _
        %s245 = sand.u32 %s21, 1
        %s246 = scalar_lea.sflag [#allocation7], %s245
        %s247 = sand.u32 %s104, 1
        %s248 = scalar_lea.vmem [#allocation8], %s247
        // Predicated region
        $region41: #{tpu_custom_call.1} parent=31 // pred_check
          %p249 = pneg %p117
        $region42: #{tpu_custom_call.1} parent=31 // pred_check_branch
          %251 = sbr.rel (%p249) target = $region44
        $region43: #{tpu_custom_call.1} parent=31 // pred_region
          %253 = dma.done %s246, 16
        $region44: #{tpu_custom_call.1} parent=31 // pred_fallthru
          _
        %p254 = pneg %p63
        %p255 = pneg %p60
        %s256 = sand.u32 %s21, 1
        %s257 = scalar_lea.sflag [#allocation7], %s256
        %s258 = sand.u32 %s78, 1
        %s259 = smul.addr %s258, 64
        %s260 = scalar_lea.vmem [#allocation6], %s259
        %p261 = pneg %p91
        %p262 = pneg %p88
        %s263 = sand.u32 %s21, 1
        %s264 = scalar_lea.sflag [#allocation7], %s263
        %s265 = sand.u32 %s104, 1
        %s266 = scalar_lea.vmem [#allocation8], %s265
        %p267 = pneg %p117
        %p268 = pneg %p114
        %p269 = pneg %p145
        %p270 = pneg %p142
        %s271 = sand.u32 %s132, 1
        %s272 = scalar_lea.sflag [#allocation5], %s271
        %s273 = sand.u32 %s132, 1
        %s274 = smul.addr %s273, 128
        %s275 = scalar_lea.vmem [#allocation9], %s274
        %s276 = smul.u32 16, %s26
        %s277 = smul.u32 16, %s28
        %s278 = smul.u32 16, %s26
        %p279 = scmp.eq.s32.totalorder %s28, 0
        // Predicated region
        $region45: #{tpu_custom_call.1} parent=31 // pred_check
          %p280 = pneg %p279
        $region46: #{tpu_custom_call.1} parent=31 // pred_check_branch
          %282 = sbr.rel (%p280) target = $region48
        $region47: #{tpu_custom_call.1} parent=31 // pred_region
          %283 = vst [vmem:[#allocation2] sm:$0xff] 0.0
          %284 = vst [vmem:[#allocation2 + $0x8] sm:$0xff] 0.0
          %285 = vst [vmem:[#allocation2 + $0x10] sm:$0xff] 0.0
          %286 = vst [vmem:[#allocation2 + $0x18] sm:$0xff] 0.0
          %287 = vst [vmem:[#allocation2 + $0x20] sm:$0xff] 0.0
          %288 = vst [vmem:[#allocation2 + $0x28] sm:$0xff] 0.0
          %289 = vst [vmem:[#allocation2 + $0x30] sm:$0xff] 0.0
          %290 = vst [vmem:[#allocation2 + $0x38] sm:$0xff] 0.0
          %291 = vst [vmem:[#allocation2 + $0x40] sm:$0xff] 0.0
          %292 = vst [vmem:[#allocation2 + $0x48] sm:$0xff] 0.0
          %293 = vst [vmem:[#allocation2 + $0x50] sm:$0xff] 0.0
          %294 = vst [vmem:[#allocation2 + $0x58] sm:$0xff] 0.0
          %295 = vst [vmem:[#allocation2 + $0x60] sm:$0xff] 0.0
          %296 = vst [vmem:[#allocation2 + $0x68] sm:$0xff] 0.0
          %297 = vst [vmem:[#allocation2 + $0x70] sm:$0xff] 0.0
          %298 = vst [vmem:[#allocation2 + $0x78] sm:$0xff] 0.0
        $region48: #{tpu_custom_call.1} parent=31 // pred_fallthru
          _
        %v299 = vld [vmem:[#allocation2] sm:$0xff]
        %v300 = vld [vmem:[#allocation2 + $0x8] sm:$0xff]
        %v301 = vld [vmem:[#allocation2 + $0x10] sm:$0xff]
        %v302 = vld [vmem:[#allocation2 + $0x18] sm:$0xff]
        %v303 = vld [vmem:[#allocation2 + $0x20] sm:$0xff]
        %v304 = vld [vmem:[#allocation2 + $0x28] sm:$0xff]
        %v305 = vld [vmem:[#allocation2 + $0x30] sm:$0xff]
        %v306 = vld [vmem:[#allocation2 + $0x38] sm:$0xff]
        %v307 = vld [vmem:[#allocation2 + $0x40] sm:$0xff]
        %v308 = vld [vmem:[#allocation2 + $0x48] sm:$0xff]
        %v309 = vld [vmem:[#allocation2 + $0x50] sm:$0xff]
        %v310 = vld [vmem:[#allocation2 + $0x58] sm:$0xff]
        %v311 = vld [vmem:[#allocation2 + $0x60] sm:$0xff]
        %v312 = vld [vmem:[#allocation2 + $0x68] sm:$0xff]
        %v313 = vld [vmem:[#allocation2 + $0x70] sm:$0xff]
        %v314 = vld [vmem:[#allocation2 + $0x78] sm:$0xff]
        %v315 = vld [vmem:[#allocation3] sm:$0xf]
        %v316 = vld [vmem:[#allocation3 + $0x4] sm:$0xf]
        %v317 = vld [vmem:[#allocation3 + $0x8] sm:$0xf]
        %v318 = vld [vmem:[#allocation3 + $0xc] sm:$0xf]
        %v319 = vld [vmem:[#allocation3 + $0x10] sm:$0xf]
        %v320 = vld [vmem:[#allocation3 + $0x14] sm:$0xf]
        %v321 = vld [vmem:[#allocation3 + $0x18] sm:$0xf]
        %v322 = vld [vmem:[#allocation3 + $0x1c] sm:$0xf]
        %v323 = vld [vmem:[#allocation3 + $0x20] sm:$0xf]
        %v324 = vld [vmem:[#allocation3 + $0x24] sm:$0xf]
        %v325 = vld [vmem:[#allocation3 + $0x28] sm:$0xf]
        %v326 = vld [vmem:[#allocation3 + $0x2c] sm:$0xf]
        %v327 = vld [vmem:[#allocation3 + $0x30] sm:$0xf]
        %v328 = vld [vmem:[#allocation3 + $0x34] sm:$0xf]
        %v329 = vld [vmem:[#allocation3 + $0x38] sm:$0xf]
        %v330 = vld [vmem:[#allocation3 + $0x3c] sm:$0xf]
        %v331 = vld [vmem:[%s239] sm:$0xf]
        %v332 = vld [vmem:[%s239 + $0x4] sm:$0xf]
        %v333 = vld [vmem:[%s239 + $0x8] sm:$0xf]
        %v334 = vld [vmem:[%s239 + $0xc] sm:$0xf]
        %v335 = vld [vmem:[%s239 + $0x10] sm:$0xf]
        %v336 = vld [vmem:[%s239 + $0x14] sm:$0xf]
        %v337 = vld [vmem:[%s239 + $0x18] sm:$0xf]
        %v338 = vld [vmem:[%s239 + $0x1c] sm:$0xf]
        %v339 = vld [vmem:[%s239 + $0x20] sm:$0xf]
        %v340 = vld [vmem:[%s239 + $0x24] sm:$0xf]
        %v341 = vld [vmem:[%s239 + $0x28] sm:$0xf]
        %v342 = vld [vmem:[%s239 + $0x2c] sm:$0xf]
        %v343 = vld [vmem:[%s239 + $0x30] sm:$0xf]
        %v344 = vld [vmem:[%s239 + $0x34] sm:$0xf]
        %v345 = vld [vmem:[%s239 + $0x38] sm:$0xf]
        %v346 = vld [vmem:[%s239 + $0x3c] sm:$0xf]
        %v363 = vunpack.c.l.b16 %v315
        %v364 = vunpack.c.l.b16 %v316
        %v365 = vunpack.c.l.b16 %v317
        %v366 = vunpack.c.l.b16 %v318
        %v367 = vunpack.c.l.b16 %v319
        %v368 = vunpack.c.l.b16 %v320
        %v369 = vunpack.c.l.b16 %v321
        %v370 = vunpack.c.l.b16 %v322
        %v371 = vunpack.c.l.b16 %v323
        %v372 = vunpack.c.l.b16 %v324
        %v373 = vunpack.c.l.b16 %v325
        %v374 = vunpack.c.l.b16 %v326
        %v375 = vunpack.c.l.b16 %v327
        %v376 = vunpack.c.l.b16 %v328
        %v377 = vunpack.c.l.b16 %v329
        %v378 = vunpack.c.l.b16 %v330
        %v379 = vpack.c.b16 %v364, %v363
        %v380 = vpack.c.b16 %v366, %v365
        %v381 = vpack.c.b16 %v368, %v367
        %v382 = vpack.c.b16 %v370, %v369
        %v383 = vpack.c.b16 %v372, %v371
        %v384 = vpack.c.b16 %v374, %v373
        %v385 = vpack.c.b16 %v376, %v375
        %v386 = vpack.c.b16 %v378, %v377
        %v411 = vunpack.c.l.b16 %v331
        %v412 = vunpack.c.l.b16 %v332
        %v413 = vunpack.c.l.b16 %v333
        %v414 = vunpack.c.l.b16 %v334
        %v415 = vunpack.c.l.b16 %v335
        %v416 = vunpack.c.l.b16 %v336
        %v417 = vunpack.c.l.b16 %v337
        %v418 = vunpack.c.l.b16 %v338
        %v419 = vunpack.c.l.b16 %v339
        %v420 = vunpack.c.l.b16 %v340
        %v421 = vunpack.c.l.b16 %v341
        %v422 = vunpack.c.l.b16 %v342
        %v423 = vunpack.c.l.b16 %v343
        %v424 = vunpack.c.l.b16 %v344
        %v425 = vunpack.c.l.b16 %v345
        %v426 = vunpack.c.l.b16 %v346
        %v427 = vpack.c.b16 %v412, %v411
        %v428 = vpack.c.b16 %v414, %v413
        %v429 = vpack.c.b16 %v416, %v415
        %v430 = vpack.c.b16 %v418, %v417
        %v431 = vpack.c.b16 %v420, %v419
        %v432 = vpack.c.b16 %v422, %v421
        %v433 = vpack.c.b16 %v424, %v423
        %v434 = vpack.c.b16 %v426, %v425
        %443 = vmatpush.bf16.msra.mxu0 %v434
        %444 = vmatpush.bf16.msra.mxu0 %v433
        %445 = vmatpush.bf16.msra.mxu0 %v432
        %446 = vmatpush.bf16.msra.mxu0 %v431
        %447 = vmatpush.bf16.msra.mxu0 %v430
        %448 = vmatpush.bf16.msra.mxu0 %v429
        %449 = vmatpush.bf16.msra.mxu0 %v428
        %450 = vmatpush.bf16.msra.mxu0 %v427
        %451 = vmatmul.bf16.gmra.mxu0 %v379
        %v452 = vpop.f32.mrf.mxu0
        %v453 = vadd.f32 0.0, %v452
        %v454 = vpop.f32.mrf.mxu0
        %v455 = vadd.f32 0.0, %v454
        %456 = vmatmul.bf16.gmra.mxu0 %v380
        %v457 = vpop.f32.mrf.mxu0
        %v458 = vadd.f32 0.0, %v457
        %v459 = vpop.f32.mrf.mxu0
        %v460 = vadd.f32 0.0, %v459
        %461 = vmatmul.bf16.gmra.mxu0 %v381
        %v462 = vpop.f32.mrf.mxu0
        %v463 = vadd.f32 0.0, %v462
        %v464 = vpop.f32.mrf.mxu0
        %v465 = vadd.f32 0.0, %v464
        %466 = vmatmul.bf16.gmra.mxu0 %v382
        %v467 = vpop.f32.mrf.mxu0
        %v468 = vadd.f32 0.0, %v467
        %v469 = vpop.f32.mrf.mxu0
        %v470 = vadd.f32 0.0, %v469
        %471 = vmatmul.bf16.gmra.mxu0 %v383
        %v472 = vpop.f32.mrf.mxu0
        %v473 = vadd.f32 0.0, %v472
        %v474 = vpop.f32.mrf.mxu0
        %v475 = vadd.f32 0.0, %v474
        %476 = vmatmul.bf16.gmra.mxu0 %v384
        %v477 = vpop.f32.mrf.mxu0
        %v478 = vadd.f32 0.0, %v477
        %v479 = vpop.f32.mrf.mxu0
        %v480 = vadd.f32 0.0, %v479
        %481 = vmatmul.bf16.gmra.mxu0 %v385
        %v482 = vpop.f32.mrf.mxu0
        %v483 = vadd.f32 0.0, %v482
        %v484 = vpop.f32.mrf.mxu0
        %v485 = vadd.f32 0.0, %v484
        %486 = vmatmul.bf16.gmra.mxu0 %v386
        %v487 = vpop.f32.mrf.mxu0
        %v488 = vadd.f32 0.0, %v487
        %v489 = vpop.f32.mrf.mxu0
        %v490 = vadd.f32 0.0, %v489
        %491 = vdwg.mxu0
        %v492 = vadd.f32 %v299, %v453
        %v493 = vadd.f32 %v300, %v455
        %v494 = vadd.f32 %v301, %v458
        %v495 = vadd.f32 %v302, %v460
        %v496 = vadd.f32 %v303, %v463
        %v497 = vadd.f32 %v304, %v465
        %v498 = vadd.f32 %v305, %v468
        %v499 = vadd.f32 %v306, %v470
        %v500 = vadd.f32 %v307, %v473
        %v501 = vadd.f32 %v308, %v475
        %v502 = vadd.f32 %v309, %v478
        %v503 = vadd.f32 %v310, %v480
        %v504 = vadd.f32 %v311, %v483
        %v505 = vadd.f32 %v312, %v485
        %v506 = vadd.f32 %v313, %v488
        %v507 = vadd.f32 %v314, %v490
        %508 = vst [vmem:[#allocation2] sm:$0xff] %v492
        %509 = vst [vmem:[#allocation2 + $0x8] sm:$0xff] %v493
        %510 = vst [vmem:[#allocation2 + $0x10] sm:$0xff] %v494
        %511 = vst [vmem:[#allocation2 + $0x18] sm:$0xff] %v495
        %512 = vst [vmem:[#allocation2 + $0x20] sm:$0xff] %v496
        %513 = vst [vmem:[#allocation2 + $0x28] sm:$0xff] %v497
        %514 = vst [vmem:[#allocation2 + $0x30] sm:$0xff] %v498
        %515 = vst [vmem:[#allocation2 + $0x38] sm:$0xff] %v499
        %516 = vst [vmem:[#allocation2 + $0x40] sm:$0xff] %v500
        %517 = vst [vmem:[#allocation2 + $0x48] sm:$0xff] %v501
        %518 = vst [vmem:[#allocation2 + $0x50] sm:$0xff] %v502
        %519 = vst [vmem:[#allocation2 + $0x58] sm:$0xff] %v503
        %520 = vst [vmem:[#allocation2 + $0x60] sm:$0xff] %v504
        %521 = vst [vmem:[#allocation2 + $0x68] sm:$0xff] %v505
        %522 = vst [vmem:[#allocation2 + $0x70] sm:$0xff] %v506
        %523 = vst [vmem:[#allocation2 + $0x78] sm:$0xff] %v507
        // Predicated region
        $region49: #{tpu_custom_call.1} parent=31 // pred_check
          %p524 = pneg %p279
        $region50: #{tpu_custom_call.1} parent=31 // pred_check_branch
          %526 = sbr.rel (%p524) target = $region52
        $region51: #{tpu_custom_call.1} parent=31 // pred_region
          %v527 = vld [vmem:[#allocation2] sm:$0xff]
          %v528 = vld [vmem:[#allocation2 + $0x8] sm:$0xff]
          %v529 = vld [vmem:[#allocation2 + $0x10] sm:$0xff]
          %v530 = vld [vmem:[#allocation2 + $0x18] sm:$0xff]
          %v531 = vld [vmem:[#allocation2 + $0x20] sm:$0xff]
          %v532 = vld [vmem:[#allocation2 + $0x28] sm:$0xff]
          %v533 = vld [vmem:[#allocation2 + $0x30] sm:$0xff]
          %v534 = vld [vmem:[#allocation2 + $0x38] sm:$0xff]
          %v535 = vld [vmem:[#allocation2 + $0x40] sm:$0xff]
          %v536 = vld [vmem:[#allocation2 + $0x48] sm:$0xff]
          %v537 = vld [vmem:[#allocation2 + $0x50] sm:$0xff]
          %v538 = vld [vmem:[#allocation2 + $0x58] sm:$0xff]
          %v539 = vld [vmem:[#allocation2 + $0x60] sm:$0xff]
          %v540 = vld [vmem:[#allocation2 + $0x68] sm:$0xff]
          %v541 = vld [vmem:[#allocation2 + $0x70] sm:$0xff]
          %v542 = vld [vmem:[#allocation2 + $0x78] sm:$0xff]
          %v543 = vld [vmem:[%s248] sm:$0x1]
          %v545 = vperm.slane %v543, 0
          %v547 = vadd.f32 %v527, %v545
          %v548 = vadd.f32 %v528, %v545
          %v549 = vadd.f32 %v529, %v545
          %v550 = vadd.f32 %v530, %v545
          %v551 = vadd.f32 %v531, %v545
          %v552 = vadd.f32 %v532, %v545
          %v553 = vadd.f32 %v533, %v545
          %v554 = vadd.f32 %v534, %v545
          %v555 = vadd.f32 %v535, %v545
          %v556 = vadd.f32 %v536, %v545
          %v557 = vadd.f32 %v537, %v545
          %v558 = vadd.f32 %v538, %v545
          %v559 = vadd.f32 %v539, %v545
          %v560 = vadd.f32 %v540, %v545
          %v561 = vadd.f32 %v541, %v545
          %v562 = vadd.f32 %v542, %v545
          %563 = vst [vmem:[%s275] sm:$0xff] %v547
          %564 = vst [vmem:[%s275 + $0x8] sm:$0xff] %v548
          %565 = vst [vmem:[%s275 + $0x10] sm:$0xff] %v549
          %566 = vst [vmem:[%s275 + $0x18] sm:$0xff] %v550
          %567 = vst [vmem:[%s275 + $0x20] sm:$0xff] %v551
          %568 = vst [vmem:[%s275 + $0x28] sm:$0xff] %v552
          %569 = vst [vmem:[%s275 + $0x30] sm:$0xff] %v553
          %570 = vst [vmem:[%s275 + $0x38] sm:$0xff] %v554
          %571 = vst [vmem:[%s275 + $0x40] sm:$0xff] %v555
          %572 = vst [vmem:[%s275 + $0x48] sm:$0xff] %v556
          %573 = vst [vmem:[%s275 + $0x50] sm:$0xff] %v557
          %574 = vst [vmem:[%s275 + $0x58] sm:$0xff] %v558
          %575 = vst [vmem:[%s275 + $0x60] sm:$0xff] %v559
          %576 = vst [vmem:[%s275 + $0x68] sm:$0xff] %v560
          %577 = vst [vmem:[%s275 + $0x70] sm:$0xff] %v561
          %578 = vst [vmem:[%s275 + $0x78] sm:$0xff] %v562
        $region52: #{tpu_custom_call.1} parent=31 // pred_fallthru
          _
        %s579 = sand.u32 %s132, 1
        %s580 = scalar_lea.sflag [#allocation5], %s579
        %s581 = sand.u32 %s132, 1
        %s582 = smul.addr %s581, 128
        %s583 = scalar_lea.vmem [#allocation9], %s582
        // Predicated region
        $region53: #{tpu_custom_call.1} parent=31 // pred_check
          %p584 = pneg %p142
        $region54: #{tpu_custom_call.1} parent=31 // pred_check_branch
          %586 = sbr.rel (%p584) target = $region56
        $region55: #{tpu_custom_call.1} parent=31 // pred_region
          %s587 = smul.u32 16, %s26
          %589 = vsyncadd %s580, 0
          %s590 = smul.addr %s587, 3
          %s591 = sadd.s32 %s27, %s590
          %s592 = smul.addr %s591, 8
          %s593 = scalar_lea.hbm %s3, %s592
          %s594 = sshll.u32 %s583, 4
          %s595 = int_to_ptr.vmem [resolvable:$true] %s594
          %s596 = sshll.u32 %s593, 4
          %s597 = int_to_ptr.hbm [resolvable:$true] %s596
          %602 = dma.vmem_to_hbm [thread:$0]  %s595, 2048, %s597, %s580, 128, 384, 8
        $region56: #{tpu_custom_call.1} parent=31 // pred_fallthru
          _
      $region32: #{tpu_custom_call.1} parent=5 // pred_fallthru
        _
      %p603 = scmp.le.s32.totalorder 2, %s16
      // Predicated region
      $region57: #{tpu_custom_call.1} parent=5 // pred_check
        %p604 = pneg %p603
      $region58: #{tpu_custom_call.1} parent=5 // pred_check_branch
        %606 = sbr.rel (%p604) target = $region60
      $region59: #{tpu_custom_call.1} parent=5 // pred_region
        %s607 = ssub.s32 %s16, 2
        // Predicated region
        $region61: #{tpu_custom_call.1} parent=59 // pred_check
          %p608 = pneg %p148
        $region62: #{tpu_custom_call.1} parent=59 // pred_check_branch
          %610 = sbr.rel (%p608) target = $region64
        $region63: #{tpu_custom_call.1} parent=59 // pred_region
          %s611 = sand.u32 %s133, 1
          %s612 = scalar_lea.sflag [#allocation5], %s611
          %s613 = sand.u32 %s133, 1
          %s614 = smul.addr %s613, 128
          %s615 = scalar_lea.vmem [#allocation9], %s614
          %617 = dma.done %s612, 2048
        $region64: #{tpu_custom_call.1} parent=59 // pred_fallthru
          _
      $region60: #{tpu_custom_call.1} parent=5 // pred_fallthru
        _
    $region6: #{tpu_custom_call.1} parent=1 // loop_footer
      %s20 = sadd.s32 1, %s16
    $region7: #{tpu_custom_call.1} parent=1 // loop_footer_branch
      %15 = sbr.rel target = $region3
    $region8: #{tpu_custom_call.1} parent=1 // loop_exit
      _
    %618 = vsyncpa [#allocation4], 1
    %s619 = scalar_lea.sflag [#allocation4], 1
    %620 = vsyncpa %s619, 1
    %621 = vsyncpa [#allocation7], 1
    %s622 = scalar_lea.sflag [#allocation7], 1
    %623 = vsyncpa %s622, 1
    %624 = vsyncpa [#allocation5], 1
    %s625 = scalar_lea.sflag [#allocation5], 1
    %626 = vsyncpa %s625, 1

</llo_original>
